<compile_context>
chip_gen: v5e
topology: v5e:2x2
jax: 0.10.0
libtpu: 0.0.40
codegen_flags: <defaults>
</compile_context>

<pallas_src>
import jax
import jax.numpy as jnp
import numpy as np
from jax.experimental import pallas as pl
from jax.experimental.pallas import tpu as pltpu

LANE = 128                    # TPU lane width (last block dim)
PAIRS_PER_ROW = LANE // 2     # 64 batch elements per 128-lane row (2 feats each)
N_LAYERS = 4
COEF_STRIDE = 4               # rows per layer in the lane-coefficient table
COEF_ROWS = N_LAYERS * COEF_STRIDE   # 16 (multiple of 8 -> clean sublane tiling)
ROW_TILE_DEFAULT = 2048       # rows/grid step -> 1 MiB block; in+out double-buffered
                              # ~4 MiB, safe on v5e/v6e/v7x scoped-VMEM defaults
SMALL_BATCH_THRESHOLD = 1024  # below this, plain jnp beats a kernel launch


def _round_up(n, m):
    return ((n + m - 1) // m) * m


def make_lane_coefs(params):
    """Pack 4 x (W (2,2) torch layout, b (2,)) into a (16, 128) f32 lane table.

    Row 4*l + 0 : w_self    (W[0,0] on even lanes, W[1,1] on odd lanes)
    Row 4*l + 1 : w_partner (W[0,1] on even lanes, W[1,0] on odd lanes)
    Row 4*l + 2 : bias      (b[0]   on even lanes, b[1]   on odd lanes)
    Row 4*l + 3 : zero padding (4-row stride per layer)

    Built once outside the per-step path; this 8 KiB table is the only
    parameter tensor the kernel sees (resident in VMEM).
    """
    is_f0 = (np.arange(LANE) % 2 == 0)
    rows = []
    for (w, b) in params:
        w = np.asarray(w, np.float32)
        b = np.asarray(b, np.float32)
        rows.append(np.where(is_f0, w[0, 0], w[1, 1]))
        rows.append(np.where(is_f0, w[0, 1], w[1, 0]))
        rows.append(np.where(is_f0, b[0], b[1]))
        rows.append(np.zeros(LANE, np.float32))
    return jnp.asarray(np.stack(rows).astype(np.float32))   # (16, 128)


def _mlp_kernel(coef_ref, x_ref, o_ref):
    """Fused 4-layer MLP on the interleaved batch-on-lanes layout.

    coef_ref : (16, 128) f32 in VMEM (per-lane self/partner/bias coefficients)
    x_ref    : (r_tile, 128) f32; lane 2k = feature 0, lane 2k+1 = feature 1 of
               batch element (row*64 + k)
    o_ref    : (r_tile, 128) f32, same interleaved layout
    """
    h = x_ref[...]
    lane = jax.lax.broadcasted_iota(jnp.int32, (1, LANE), 1)
    is_f0 = (lane % 2) == 0                     # (1, 128): True on feature-0 lanes

    for l in range(N_LAYERS):
        w_self = coef_ref[COEF_STRIDE * l + 0:COEF_STRIDE * l + 1, :]   # (1, 128)
        w_part = coef_ref[COEF_STRIDE * l + 1:COEF_STRIDE * l + 2, :]
        bias   = coef_ref[COEF_STRIDE * l + 2:COEF_STRIDE * l + 3, :]
        # The partner feature of the same batch element lives in the adjacent
        # lane: even lanes read lane+1, odd lanes read lane-1.  Wrap-around
        # lanes of each roll are never selected.  Rolls use the XLU slot (free).
        partner = jnp.where(is_f0,
                            pltpu.roll(h, LANE - 1, axis=1),   # h[lane + 1]
                            pltpu.roll(h, 1, axis=1))          # h[lane - 1]
        # torch Linear: y_i = W[i,0]*x0 + W[i,1]*x1 + b_i, folded per lane parity.
        h = w_self * h + w_part * partner + bias
        if l < N_LAYERS - 1:                    # ReLU after fc1, fc2, fc3 only
            h = jnp.maximum(h, 0.0)

    o_ref[...] = h


def mlp_forward(x, params, coef=None, *, row_tile=ROW_TILE_DEFAULT,
                min_pallas_batch=SMALL_BATCH_THRESHOLD):
    """Forward pass of `sample`.  x: (B, 2) float.  params: 4 x (W(2,2), b(2,))."""
    B, f = x.shape
    assert f == 2, "sample expects 2 input features"
    x = x.astype(jnp.float32)

    # Small-batch fast path: exact f32 elementwise math, no pallas_call.
    if B < min_pallas_batch:
        h = x
        for i, (w, b) in enumerate(params):
            w = jnp.asarray(w, jnp.float32)
            b = jnp.asarray(b, jnp.float32)
            h0, h1 = h[:, 0:1], h[:, 1:2]
            y0 = w[0, 0] * h0 + w[0, 1] * h1 + b[0]
            y1 = w[1, 0] * h0 + w[1, 1] * h1 + b[1]
            h = jnp.concatenate([y0, y1], axis=1)
            if i < N_LAYERS - 1:
                h = jnp.maximum(h, 0.0)
        return h

    if coef is None:
        coef = make_lane_coefs(params)

    # Reinterpret the row-major (B, 2) input as (rows, 128): pure reshape, no
    # transpose / extra HBM pass (only one fused jnp.pad when B is unaligned).
    rows = pl.cdiv(B, PAIRS_PER_ROW)
    row_tile = _round_up(max(int(row_tile), 8), 8)
    # Prefer >= 2 grid steps whenever the data allows it (v7x megacore).
    r_tile = min(row_tile, _round_up(max(pl.cdiv(rows, 2), 1), 8))
    rows_pad = _round_up(rows, r_tile)
    b_pad = rows_pad * PAIRS_PER_ROW

    if b_pad != B:
        x = jnp.pad(x, ((0, b_pad - B), (0, 0)))   # single fused pad pass
    x_rows = jnp.reshape(x, (rows_pad, LANE))       # free reinterpretation

    out = pl.pallas_call(
        _mlp_kernel,
        out_shape=jax.ShapeDtypeStruct((rows_pad, LANE), jnp.float32),
        grid=(rows_pad // r_tile,),
        in_specs=[
            pl.BlockSpec((COEF_ROWS, LANE), lambda i: (0, 0)),   # resident coef table
            pl.BlockSpec((r_tile, LANE), lambda i: (i, 0)),      # streamed batch tile
        ],
        out_specs=pl.BlockSpec((r_tile, LANE), lambda i: (i, 0)),
        compiler_params=pltpu.CompilerParams(
            dimension_semantics=("parallel",)),
    )(coef, x_rows)

    out = jnp.reshape(out, (b_pad, 2))
    return out if b_pad == B else out[:B]


if __name__ == "__main__":
    key = jax.random.PRNGKey(0)
    k_in, *k_params = jax.random.split(key, 1 + 2 * N_LAYERS)

    # Deterministic parameter init (shapes from sample.__init__: 4 x Linear(2, 2)).
    params = []
    for i in range(N_LAYERS):
        w = jax.random.normal(k_params[2 * i], (2, 2), jnp.float32) * 0.5
        b = jax.random.normal(k_params[2 * i + 1], (2,), jnp.float32) * 0.1
        params.append((w, b))

    coef = make_lane_coefs(params)   # built once, reused per call

    def numpy_ref(x):
        h = np.asarray(x, np.float32)
        for i, (w, b) in enumerate(params):
            h = h @ np.asarray(w, np.float32).T + np.asarray(b, np.float32)
            if i < N_LAYERS - 1:
                h = np.maximum(h, 0.0)
        return h

    # 1) Tiny batch -> jnp fast path (no kernel launch).
    x_small = jax.random.normal(k_in, (8, 2), jnp.float32)
    y_small = jax.block_until_ready(mlp_forward(x_small, params, coef))
    assert np.allclose(np.asarray(y_small), numpy_ref(x_small), atol=1e-5, rtol=1e-5)

    # 2) Pallas path, single grid step, batch not a multiple of 64 (pad/strip).
    x_mid = jax.random.normal(jax.random.PRNGKey(1), (200, 2), jnp.float32)
    y_mid = jax.block_until_ready(
        mlp_forward(x_mid, params, coef, min_pallas_batch=0))
    assert np.allclose(np.asarray(y_mid), numpy_ref(x_mid), atol=1e-5, rtol=1e-5)

    # 3) Pallas path, multi-step grid (exercises pipelining / both TCs on v7x).
    x_big = jax.random.normal(jax.random.PRNGKey(2), (1536, 2), jnp.float32)
    y_big = jax.block_until_ready(
        mlp_forward(x_big, params, coef, min_pallas_batch=0))
    assert np.allclose(np.asarray(y_big), numpy_ref(x_big), atol=1e-5, rtol=1e-5)

    print("KERNEL_OK")
</pallas_src>

<mosaic_0001>
module attributes {stable_mosaic.version = 11 : i64} {
  func.func @_mlp_kernel(%arg0: i32, %arg1: memref<16x128xf32, #tpu.memory_space<vmem>>, %arg2: memref<8x128xf32, #tpu.memory_space<vmem>>, %arg3: memref<8x128xf32, #tpu.memory_space<vmem>>) attributes {dimension_semantics = [#tpu.dimension_semantics<parallel>], iteration_bounds = array<i64: 1>, scalar_prefetch = 0 : i64, scratch_operands = 0 : i64, tpu.core_type = #tpu.core_type<tc>, window_params = [{pipeline_mode = #tpu.pipeline_mode<synchronous>, transform_indices = @transform_0, window_bounds = array<i64: 16, 128>}, {transform_indices = @transform_1, window_bounds = array<i64: 8, 128>}, {transform_indices = @transform_2, window_bounds = array<i64: 8, 128>}]} {
    %c0 = arith.constant 0 : index
    %c0_0 = arith.constant 0 : index
    %0 = vector.load %arg2[%c0, %c0_0] : memref<8x128xf32, #tpu.memory_space<vmem>>, vector<8x128xf32>
    %1 = tpu.iota {dimensions = array<i32: 1>} : vector<1x128xi32>
    %c2_i32 = arith.constant 2 : i32
    %c0_i32 = arith.constant 0 : i32
    %2 = arith.cmpi eq, %c2_i32, %c0_i32 : i32
    %c1_i32 = arith.constant 1 : i32
    %3 = arith.select %2, %c1_i32, %c2_i32 : i32
    %4 = vector.broadcast %3 : i32 to vector<1x128xi32>
    %5 = arith.remsi %1, %4 : vector<1x128xi32>
    %c0_i32_1 = arith.constant 0 : i32
    %6 = vector.broadcast %c0_i32_1 : i32 to vector<1x128xi32>
    %7 = arith.cmpi ne, %5, %6 : vector<1x128xi32>
    %c0_i32_2 = arith.constant 0 : i32
    %8 = vector.broadcast %c0_i32_2 : i32 to vector<1x128xi32>
    %9 = arith.cmpi slt, %5, %8 : vector<1x128xi32>
    %c0_i32_3 = arith.constant 0 : i32
    %10 = arith.cmpi slt, %3, %c0_i32_3 : i32
    %11 = vector.broadcast %10 : i1 to vector<1x128xi1>
    %12 = vector.broadcast %11 : vector<1x128xi1> to vector<1x128xi1>
    %13 = arith.xori %9, %12 : vector<1x128xi1>
    %14 = arith.andi %13, %7 : vector<1x128xi1>
    %15 = vector.broadcast %3 : i32 to vector<1x128xi32>
    %16 = arith.addi %5, %15 : vector<1x128xi32>
    %17 = arith.select %14, %16, %5 : vector<1x128xi1>, vector<1x128xi32>
    %c0_i32_4 = arith.constant 0 : i32
    %18 = vector.broadcast %c0_i32_4 : i32 to vector<1x128xi32>
    %19 = arith.cmpi eq, %17, %18 : vector<1x128xi32>
    %c0_5 = arith.constant 0 : index
    %c0_6 = arith.constant 0 : index
    %20 = vector.load %arg1[%c0_5, %c0_6] : memref<16x128xf32, #tpu.memory_space<vmem>>, vector<1x128xf32>
    %c1 = arith.constant 1 : index
    %c0_7 = arith.constant 0 : index
    %21 = vector.load %arg1[%c1, %c0_7] : memref<16x128xf32, #tpu.memory_space<vmem>>, vector<1x128xf32>
    %c2 = arith.constant 2 : index
    %c0_8 = arith.constant 0 : index
    %22 = vector.load %arg1[%c2, %c0_8] : memref<16x128xf32, #tpu.memory_space<vmem>>, vector<1x128xf32>
    %c127_i32 = arith.constant 127 : i32
    %23 = tpu.dynamic_rotate %0 by %c127_i32 dim 1 : vector<8x128xf32>, i32 -> vector<8x128xf32>
    %c1_i32_9 = arith.constant 1 : i32
    %24 = tpu.dynamic_rotate %0 by %c1_i32_9 dim 1 : vector<8x128xf32>, i32 -> vector<8x128xf32>
    %25 = vector.shape_cast %19 : vector<1x128xi1> to vector<1x128xi1>
    %26 = vector.broadcast %25 : vector<1x128xi1> to vector<8x128xi1>
    %27 = arith.select %26, %23, %24 : vector<8x128xi1>, vector<8x128xf32>
    %28 = vector.broadcast %20 : vector<1x128xf32> to vector<8x128xf32>
    %29 = arith.mulf %28, %0 : vector<8x128xf32>
    %30 = vector.broadcast %21 : vector<1x128xf32> to vector<8x128xf32>
    %31 = arith.mulf %30, %27 : vector<8x128xf32>
    %32 = arith.addf %29, %31 : vector<8x128xf32>
    %33 = vector.broadcast %22 : vector<1x128xf32> to vector<8x128xf32>
    %34 = arith.addf %32, %33 : vector<8x128xf32>
    %cst = arith.constant 0.000000e+00 : f32
    %35 = vector.broadcast %cst : f32 to vector<8x128xf32>
    %36 = arith.maximumf %34, %35 : vector<8x128xf32>
    %c4 = arith.constant 4 : index
    %c0_10 = arith.constant 0 : index
    %37 = vector.load %arg1[%c4, %c0_10] : memref<16x128xf32, #tpu.memory_space<vmem>>, vector<1x128xf32>
    %c5 = arith.constant 5 : index
    %c0_11 = arith.constant 0 : index
    %38 = vector.load %arg1[%c5, %c0_11] : memref<16x128xf32, #tpu.memory_space<vmem>>, vector<1x128xf32>
    %c6 = arith.constant 6 : index
    %c0_12 = arith.constant 0 : index
    %39 = vector.load %arg1[%c6, %c0_12] : memref<16x128xf32, #tpu.memory_space<vmem>>, vector<1x128xf32>
    %c127_i32_13 = arith.constant 127 : i32
    %40 = tpu.dynamic_rotate %36 by %c127_i32_13 dim 1 : vector<8x128xf32>, i32 -> vector<8x128xf32>
    %c1_i32_14 = arith.constant 1 : i32
    %41 = tpu.dynamic_rotate %36 by %c1_i32_14 dim 1 : vector<8x128xf32>, i32 -> vector<8x128xf32>
    %42 = vector.shape_cast %19 : vector<1x128xi1> to vector<1x128xi1>
    %43 = vector.broadcast %42 : vector<1x128xi1> to vector<8x128xi1>
    %44 = arith.select %43, %40, %41 : vector<8x128xi1>, vector<8x128xf32>
    %45 = vector.broadcast %37 : vector<1x128xf32> to vector<8x128xf32>
    %46 = arith.mulf %45, %36 : vector<8x128xf32>
    %47 = vector.broadcast %38 : vector<1x128xf32> to vector<8x128xf32>
    %48 = arith.mulf %47, %44 : vector<8x128xf32>
    %49 = arith.addf %46, %48 : vector<8x128xf32>
    %50 = vector.broadcast %39 : vector<1x128xf32> to vector<8x128xf32>
    %51 = arith.addf %49, %50 : vector<8x128xf32>
    %cst_15 = arith.constant 0.000000e+00 : f32
    %52 = vector.broadcast %cst_15 : f32 to vector<8x128xf32>
    %53 = arith.maximumf %51, %52 : vector<8x128xf32>
    %c8 = arith.constant 8 : index
    %c0_16 = arith.constant 0 : index
    %54 = vector.load %arg1[%c8, %c0_16] : memref<16x128xf32, #tpu.memory_space<vmem>>, vector<1x128xf32>
    %c9 = arith.constant 9 : index
    %c0_17 = arith.constant 0 : index
    %55 = vector.load %arg1[%c9, %c0_17] : memref<16x128xf32, #tpu.memory_space<vmem>>, vector<1x128xf32>
    %c10 = arith.constant 10 : index
    %c0_18 = arith.constant 0 : index
    %56 = vector.load %arg1[%c10, %c0_18] : memref<16x128xf32, #tpu.memory_space<vmem>>, vector<1x128xf32>
    %c127_i32_19 = arith.constant 127 : i32
    %57 = tpu.dynamic_rotate %53 by %c127_i32_19 dim 1 : vector<8x128xf32>, i32 -> vector<8x128xf32>
    %c1_i32_20 = arith.constant 1 : i32
    %58 = tpu.dynamic_rotate %53 by %c1_i32_20 dim 1 : vector<8x128xf32>, i32 -> vector<8x128xf32>
    %59 = vector.shape_cast %19 : vector<1x128xi1> to vector<1x128xi1>
    %60 = vector.broadcast %59 : vector<1x128xi1> to vector<8x128xi1>
    %61 = arith.select %60, %57, %58 : vector<8x128xi1>, vector<8x128xf32>
    %62 = vector.broadcast %54 : vector<1x128xf32> to vector<8x128xf32>
    %63 = arith.mulf %62, %53 : vector<8x128xf32>
    %64 = vector.broadcast %55 : vector<1x128xf32> to vector<8x128xf32>
    %65 = arith.mulf %64, %61 : vector<8x128xf32>
    %66 = arith.addf %63, %65 : vector<8x128xf32>
    %67 = vector.broadcast %56 : vector<1x128xf32> to vector<8x128xf32>
    %68 = arith.addf %66, %67 : vector<8x128xf32>
    %cst_21 = arith.constant 0.000000e+00 : f32
    %69 = vector.broadcast %cst_21 : f32 to vector<8x128xf32>
    %70 = arith.maximumf %68, %69 : vector<8x128xf32>
    %c12 = arith.constant 12 : index
    %c0_22 = arith.constant 0 : index
    %71 = vector.load %arg1[%c12, %c0_22] : memref<16x128xf32, #tpu.memory_space<vmem>>, vector<1x128xf32>
    %c13 = arith.constant 13 : index
    %c0_23 = arith.constant 0 : index
    %72 = vector.load %arg1[%c13, %c0_23] : memref<16x128xf32, #tpu.memory_space<vmem>>, vector<1x128xf32>
    %c14 = arith.constant 14 : index
    %c0_24 = arith.constant 0 : index
    %73 = vector.load %arg1[%c14, %c0_24] : memref<16x128xf32, #tpu.memory_space<vmem>>, vector<1x128xf32>
    %c127_i32_25 = arith.constant 127 : i32
    %74 = tpu.dynamic_rotate %70 by %c127_i32_25 dim 1 : vector<8x128xf32>, i32 -> vector<8x128xf32>
    %c1_i32_26 = arith.constant 1 : i32
    %75 = tpu.dynamic_rotate %70 by %c1_i32_26 dim 1 : vector<8x128xf32>, i32 -> vector<8x128xf32>
    %76 = vector.shape_cast %19 : vector<1x128xi1> to vector<1x128xi1>
    %77 = vector.broadcast %76 : vector<1x128xi1> to vector<8x128xi1>
    %78 = arith.select %77, %74, %75 : vector<8x128xi1>, vector<8x128xf32>
    %79 = vector.broadcast %71 : vector<1x128xf32> to vector<8x128xf32>
    %80 = arith.mulf %79, %70 : vector<8x128xf32>
    %81 = vector.broadcast %72 : vector<1x128xf32> to vector<8x128xf32>
    %82 = arith.mulf %81, %78 : vector<8x128xf32>
    %83 = arith.addf %80, %82 : vector<8x128xf32>
    %84 = vector.broadcast %73 : vector<1x128xf32> to vector<8x128xf32>
    %85 = arith.addf %83, %84 : vector<8x128xf32>
    %c0_27 = arith.constant 0 : index
    %c0_28 = arith.constant 0 : index
    %86 = vector.load %arg3[%c0_27, %c0_28] : memref<8x128xf32, #tpu.memory_space<vmem>>, vector<8x128xf32>
    tpu.vector_store %arg3[%c0_27, %c0_28], %85 {strides = array<i32>} : memref<8x128xf32, #tpu.memory_space<vmem>>, vector<8x128xf32>,
    return
  }
  func.func @transform_0(%arg0: i32) -> (i32, i32) {
    %c0_i32 = arith.constant 0 : i32
    %c0_i32_0 = arith.constant 0 : i32
    %c0_i32_1 = arith.constant 0 : i32
    return %c0_i32, %c0_i32_0 : i32, i32
  }
  func.func @transform_1(%arg0: i32) -> (i32, i32) {
    %c0_i32 = arith.constant 0 : i32
    %c0_i32_0 = arith.constant 0 : i32
    return %arg0, %c0_i32 : i32, i32
  }
  func.func @transform_2(%arg0: i32) -> (i32, i32) {
    %c0_i32 = arith.constant 0 : i32
    %c0_i32_0 = arith.constant 0 : i32
    return %arg0, %c0_i32 : i32, i32
  }
}

</mosaic_0001>

<llo_original>
// kernel: tpu_custom_call.1
$region0: #{tpu_custom_call.1}
  #allocation0 [shape = 'u32[]', space=smem, size = 0x4, offset = 0x4, fixed_abs, tag = 'smem constant byte address 0x4 - core index']
  #allocation1 [shape = 'u32[72,128]{1,0:T(1,128)}', space=vmem, size = 0x9000, scoped, tag = 'internal scratch']
  %s0 = inlined_call_operand.hbm [shape: f32[16,128], index: 0, kind: input, shape index: {}]
  %s1 = inlined_call_operand.hbm [shape: f32[8,128], index: 1, kind: input, shape index: {}]
  %s2 = inlined_call_operand.hbm [shape: f32[8,128], index: 2, kind: output, shape index: {}]
  %s3 = sld [smem:[#allocation0]]
  $region26: #{tpu_custom_call.1} parent=0
    _
  %s5 = ssub.s32 1, %s3
  %s6 = scalar_select 0, %s5, %s3
  $region1: #{tpu_custom_call.1} parent=0
    #allocation2 [shape = 'u8[8192]{0}', space=vmem, size = 0x2000, scoped, tag = 'input window, operand 0, single buffered']
    #allocation3 [shape = 's32[1]{0}', space=sflag, size = 0x4, scoped, tag = 'scoped memory for tpu_custom_call.1']
    #allocation4 [shape = 's32[1]{0}', space=sflag, size = 0x4, scoped, tag = 'scoped memory for tpu_custom_call.1']
    #allocation5 [shape = 'u8[4096]{0}', space=vmem, size = 0x1000, scoped, tag = 'input window, operand 1, single buffered']
    #allocation6 [shape = 's32[1]{0}', space=sflag, size = 0x4, scoped, tag = 'scoped memory for tpu_custom_call.1']
    #allocation7 [shape = 'u8[4096]{0}', space=vmem, size = 0x1000, scoped, tag = 'output window, operand 0, single buffered']
    %7 = vsyncpa [#allocation3], 0
    %8 = vsyncpa [#allocation6], 0
    %9 = vsyncpa [#allocation4], 0
    // Predicated region
    $region2: #{tpu_custom_call.1} parent=1 // pred_check
      _
    $region3: #{tpu_custom_call.1} parent=1 // pred_check_branch
      %11 = sbr.rel (0) target = $region5
    $region4: #{tpu_custom_call.1} parent=1 // pred_region
      %13 = vsyncadd [#allocation3], 0
      %s14 = sshll.u32 %s0, 4
      %s15 = int_to_ptr.hbm [resolvable:$true] %s14
      %s16 = sshll.u32 [#allocation2], 4
      %s17 = int_to_ptr.vmem [resolvable:$true] %s16
      %22 = dma.hbm_to_vmem [thread:$0]  %s15, 256, %s17, [#allocation3], 128, 128, 8
    $region5: #{tpu_custom_call.1} parent=1 // pred_fallthru
      _
    // Predicated region
    $region6: #{tpu_custom_call.1} parent=1 // pred_check
      _
    $region7: #{tpu_custom_call.1} parent=1 // pred_check_branch
      %24 = sbr.rel (0) target = $region9
    $region8: #{tpu_custom_call.1} parent=1 // pred_region
      %26 = vsyncadd [#allocation6], 0
      %s28 = sshll.u32 %s1, 4
      %s29 = int_to_ptr.hbm [resolvable:$true] %s28
      %s30 = sshll.u32 [#allocation5], 4
      %s31 = int_to_ptr.vmem [resolvable:$true] %s30
      %33 = dma.hbm_to_vmem [thread:$0]  %s29, 128, %s31, [#allocation6]
    $region9: #{tpu_custom_call.1} parent=1 // pred_fallthru
      _
    // Predicated region
    $region10: #{tpu_custom_call.1} parent=1 // pred_check
      _
    $region11: #{tpu_custom_call.1} parent=1 // pred_check_branch
      %35 = sbr.rel (0) target = $region13
    $region12: #{tpu_custom_call.1} parent=1 // pred_region
      %37 = dma.done [#allocation3], 256
    $region13: #{tpu_custom_call.1} parent=1 // pred_fallthru
      _
    // Predicated region
    $region14: #{tpu_custom_call.1} parent=1 // pred_check
      _
    $region15: #{tpu_custom_call.1} parent=1 // pred_check_branch
      %39 = sbr.rel (0) target = $region17
    $region16: #{tpu_custom_call.1} parent=1 // pred_region
      %41 = dma.done [#allocation6], 128
    $region17: #{tpu_custom_call.1} parent=1 // pred_fallthru
      _
    %v42 = vld [vmem:[#allocation5] sm:$0xff]
    %v43 = vlaneseq
    %v44 = vand.u32 %v43, 127
    %vm45 = vcmp.lt.s32.totalorder %v44, 0
    %v46 = vsub.s32 0, %v44
    %v47 = vsel %vm45, %v46, %v44
    %v48 = vshrl.u32 %v47, 1
    %v49 = vand.u32 %v47, 1
    %v50 = vsub.s32 0, %v49
    %v51 = vsel %vm45, %v50, %v49
    %vm52 = vcmp.ne.s32.totalorder %v51, 0
    %vm53 = vcmp.lt.s32.totalorder %v51, 0
    %vm54 = vmand %vm53, %vm52
    %v55 = vadd.s32 %v51, 2
    %v56 = vsel %vm54, %v55, %v51
    %vm57 = vcmp.eq.s32.totalorder %v56, 0
    %v58 = vld [vmem:[#allocation2] sm:$0x1]
    %v59 = vld [vmem:[#allocation2 + $0x1] sm:$0x1]
    %v60 = vld [vmem:[#allocation2 + $0x2] sm:$0x1]
    %61 = vrot.lane.b32.xlu0 %v42, 127
    %v62 = vpop.permute.xlu0 %61
    %63 = vrot.lane.b32.xlu0 %v42, 1
    %v64 = vpop.permute.xlu0 %63
    %v65 = vsel %vm57, 1, 0
    %vm66 = vcmp.eq.s32.totalorder %v65, 1
    %v67 = vsel %vm66, %v62, %v64
    %v68 = vperm.slane %v58, 0
    %v69 = vmul.f32 %v68, %v42
    %v70 = vperm.slane %v59, 0
    %v71 = vmul.f32 %v70, %v67
    %v72 = vadd.f32 %v69, %v71
    %v73 = vperm.slane %v60, 0
    %v74 = vadd.f32 %v72, %v73
    %v75 = vmax.f32 %v74, 0.0
    %v76 = vld [vmem:[#allocation2 + $0x4] sm:$0x1]
    %v77 = vld [vmem:[#allocation2 + $0x5] sm:$0x1]
    %v78 = vld [vmem:[#allocation2 + $0x6] sm:$0x1]
    %79 = vrot.lane.b32.xlu0 %v75, 127
    %v80 = vpop.permute.xlu0 %79
    %81 = vrot.lane.b32.xlu0 %v75, 1
    %v82 = vpop.permute.xlu0 %81
    %v83 = vsel %vm66, %v80, %v82
    %v84 = vperm.slane %v76, 0
    %v85 = vmul.f32 %v84, %v75
    %v86 = vperm.slane %v77, 0
    %v87 = vmul.f32 %v86, %v83
    %v88 = vadd.f32 %v85, %v87
    %v89 = vperm.slane %v78, 0
    %v90 = vadd.f32 %v88, %v89
    %v91 = vmax.f32 %v90, 0.0
    %v92 = vld [vmem:[#allocation2 + $0x8] sm:$0x1]
    %v93 = vld [vmem:[#allocation2 + $0x9] sm:$0x1]
    %v94 = vld [vmem:[#allocation2 + $0xa] sm:$0x1]
    %95 = vrot.lane.b32.xlu0 %v91, 127
    %v96 = vpop.permute.xlu0 %95
    %97 = vrot.lane.b32.xlu0 %v91, 1
    %v98 = vpop.permute.xlu0 %97
    %v99 = vsel %vm66, %v96, %v98
    %v100 = vperm.slane %v92, 0
    %v101 = vmul.f32 %v100, %v91
    %v102 = vperm.slane %v93, 0
    %v103 = vmul.f32 %v102, %v99
    %v104 = vadd.f32 %v101, %v103
    %v105 = vperm.slane %v94, 0
    %v106 = vadd.f32 %v104, %v105
    %v107 = vmax.f32 %v106, 0.0
    %v108 = vld [vmem:[#allocation2 + $0xc] sm:$0x1]
    %v109 = vld [vmem:[#allocation2 + $0xd] sm:$0x1]
    %v110 = vld [vmem:[#allocation2 + $0xe] sm:$0x1]
    %111 = vrot.lane.b32.xlu0 %v107, 127
    %v112 = vpop.permute.xlu0 %111
    %113 = vrot.lane.b32.xlu0 %v107, 1
    %v114 = vpop.permute.xlu0 %113
    %v115 = vsel %vm66, %v112, %v114
    %v116 = vperm.slane %v108, 0
    %v117 = vmul.f32 %v116, %v107
    %v118 = vperm.slane %v109, 0
    %v119 = vmul.f32 %v118, %v115
    %v120 = vadd.f32 %v117, %v119
    %v121 = vperm.slane %v110, 0
    %v122 = vadd.f32 %v120, %v121
    %123 = vst [vmem:[#allocation7] sm:$0xff] %v122
    // Predicated region
    $region18: #{tpu_custom_call.1} parent=1 // pred_check
      _
    $region19: #{tpu_custom_call.1} parent=1 // pred_check_branch
      %125 = sbr.rel (0) target = $region21
    $region20: #{tpu_custom_call.1} parent=1 // pred_region
      %127 = vsyncadd [#allocation4], 0
      %s129 = sshll.u32 [#allocation7], 4
      %s130 = int_to_ptr.vmem [resolvable:$true] %s129
      %s131 = sshll.u32 %s2, 4
      %s132 = int_to_ptr.hbm [resolvable:$true] %s131
      %134 = dma.vmem_to_hbm [thread:$0]  %s130, 128, %s132, [#allocation4]
    $region21: #{tpu_custom_call.1} parent=1 // pred_fallthru
      _
    // Predicated region
    $region22: #{tpu_custom_call.1} parent=1 // pred_check
      _
    $region23: #{tpu_custom_call.1} parent=1 // pred_check_branch
      %136 = sbr.rel (0) target = $region25
    $region24: #{tpu_custom_call.1} parent=1 // pred_region
      %138 = dma.done [#allocation4], 128
    $region25: #{tpu_custom_call.1} parent=1 // pred_fallthru
      _
    %139 = vsyncpa [#allocation3], 1
    %140 = vsyncpa [#allocation6], 1
    %141 = vsyncpa [#allocation4], 1

</llo_original>
